<compile_context>
chip_gen: v6e
topology: v6e:2x2x1
jax: 0.10.0
libtpu: 0.0.40
codegen_flags: <defaults>
</compile_context>

<pallas_src>
import functools

import jax
import jax.numpy as jnp
from jax.experimental import pallas as pl
from jax.experimental.pallas import tpu as pltpu


def _round_up(x: int, m: int) -> int:
    return ((x + m - 1) // m) * m


def _ssd_loss_kernel(conf_ref, loc_ref, tgt_ref,
                     neg_ce_ref, stats_ref,
                     pos_acc, loc_acc, cnt_acc,
                     *, num_anchors: int):
    """Per-(batch item, N-tile) hot path.

    Refs (leading B dim squeezed by BlockSpec):
      conf_ref : (C, TILE_N)  logits
      loc_ref  : (4, TILE_N)  predicted boxes
      tgt_ref  : (5, TILE_N)  [x1, y1, x2, y2, class_id]
      neg_ce_ref : (1, TILE_N)  background-CE of negative anchors (0 elsewhere)
      stats_ref  : (1, 128)     lane0 = sum positive CE, lane1 = sum GIoU loss,
                                lane2 = #matched (written on last N-tile)
    """
    n_idx = pl.program_id(1)
    n_last = pl.num_programs(1) - 1
    tile_n = neg_ce_ref.shape[-1]

    @pl.when(n_idx == 0)
    def _init():
        pos_acc[...] = jnp.zeros_like(pos_acc)
        loc_acc[...] = jnp.zeros_like(loc_acc)
        cnt_acc[...] = jnp.zeros_like(cnt_acc)

    # Transfer stays in the input dtype (e.g. bf16); all math in f32.
    logits = conf_ref[...].astype(jnp.float32)   # (C, TILE_N)
    loc = loc_ref[...].astype(jnp.float32)       # (4, TILE_N)
    tgt = tgt_ref[...].astype(jnp.float32)       # (5, TILE_N)
    C = logits.shape[0]

    # Validity mask for the lane padding of N up to a multiple of TILE_N.
    lane = jax.lax.broadcasted_iota(jnp.int32, (1, tile_n), 1)
    valid = (n_idx * tile_n + lane) < num_anchors

    tgt_cls = tgt[4:5, :].astype(jnp.int32)                       # (1, TILE_N)
    pos_mask = jnp.logical_and(tgt_cls > 0, valid).astype(jnp.float32)
    neg_mask = jnp.logical_and(tgt_cls == 0, valid).astype(jnp.float32)

    # ---- cross entropy via stable log-softmax; C-reductions unrolled (C is tiny) ----
    row0 = logits[0:1, :]
    m = row0
    for c in range(1, C):
        m = jnp.maximum(m, logits[c:c + 1, :])
    sum_exp = jnp.zeros_like(m)
    for c in range(C):
        sum_exp = sum_exp + jnp.exp(logits[c:c + 1, :] - m)
    lse = m + jnp.log(sum_exp)                                    # (1, TILE_N)

    # gather logit at the target class with C cheap selects (no onehot materialization)
    logit_at_tgt = row0
    for c in range(1, C):
        logit_at_tgt = jnp.where(tgt_cls == c, logits[c:c + 1, :], logit_at_tgt)

    ce_target = lse - logit_at_tgt     # CE vs. target class (positives)
    ce_zero = lse - row0               # CE vs. background class 0 (negatives)

    neg_ce_ref[...] = neg_mask * ce_zero

    # ---- generalized box IoU loss (torchvision semantics, eps=1e-7) ----
    eps = 1e-7
    x1, y1, x2, y2 = loc[0:1, :], loc[1:2, :], loc[2:3, :], loc[3:4, :]
    x1g, y1g, x2g, y2g = tgt[0:1, :], tgt[1:2, :], tgt[2:3, :], tgt[3:4, :]

    xi1 = jnp.maximum(x1, x1g)
    yi1 = jnp.maximum(y1, y1g)
    xi2 = jnp.minimum(x2, x2g)
    yi2 = jnp.minimum(y2, y2g)
    iw = xi2 - xi1
    ih = yi2 - yi1
    inter = jnp.where(jnp.logical_and(iw > 0.0, ih > 0.0), iw * ih, 0.0)
    union = (x2 - x1) * (y2 - y1) + (x2g - x1g) * (y2g - y1g) - inter
    iou = inter * pl.reciprocal(union + eps, approx=True)

    xc1 = jnp.minimum(x1, x1g)
    yc1 = jnp.minimum(y1, y1g)
    xc2 = jnp.maximum(x2, x2g)
    yc2 = jnp.maximum(y2, y2g)
    area_c = (xc2 - xc1) * (yc2 - yc1)
    giou = iou - (area_c - union) * pl.reciprocal(area_c + eps, approx=True)
    giou_loss = 1.0 - giou                                        # (1, TILE_N)

    # ---- lane-wise accumulation; single cross-lane reduce at the very end ----
    pos_acc[...] = pos_acc[...] + pos_mask * ce_target
    loc_acc[...] = loc_acc[...] + pos_mask * giou_loss
    cnt_acc[...] = cnt_acc[...] + pos_mask

    @pl.when(n_idx == n_last)
    def _finalize():
        pos_sum = jnp.sum(pos_acc[...])
        loc_sum = jnp.sum(loc_acc[...])
        n_match = jnp.sum(cnt_acc[...])
        out_lane = jax.lax.broadcasted_iota(jnp.int32, (1, 128), 1)
        stats = jnp.where(out_lane == 0, pos_sum,
                jnp.where(out_lane == 1, loc_sum,
                jnp.where(out_lane == 2, n_match, 0.0)))
        stats_ref[...] = stats


def ssd_loss(confidences, localizations, targets, alpha=1.0, tile_n=1024):
    """Returns (batch_loss, {'conf': ..., 'loc': ...}) matching SSDLoss.forward.

    confidences: (B, N, C), localizations: (B, N, 4), targets: (B, N, 5).
    """
    B, N, C = confidences.shape

    # Tile over N (lane axis); tiles are multiples of 128 for lane-dense stores.
    tile_n = min(tile_n, _round_up(N, 128))
    tile_n = _round_up(tile_n, 128)
    n_pad = _round_up(N, tile_n)
    n_tiles = n_pad // tile_n
    pad = n_pad - N

    # Put anchors on lanes; pad with zeros (padded anchors => class 0, zero boxes).
    conf_t = jnp.transpose(confidences, (0, 2, 1))        # (B, C, N)
    loc_t = jnp.transpose(localizations, (0, 2, 1))       # (B, 4, N)
    tgt_t = jnp.transpose(targets, (0, 2, 1))             # (B, 5, N)
    if pad:
        conf_t = jnp.pad(conf_t, ((0, 0), (0, 0), (0, pad)))
        loc_t = jnp.pad(loc_t, ((0, 0), (0, 0), (0, pad)))
        tgt_t = jnp.pad(tgt_t, ((0, 0), (0, 0), (0, pad)))

    kernel = functools.partial(_ssd_loss_kernel, num_anchors=N)

    bytes_in = (conf_t.size * conf_t.dtype.itemsize
                + loc_t.size * loc_t.dtype.itemsize
                + tgt_t.size * tgt_t.dtype.itemsize)
    cost = pl.CostEstimate(
        flops=int(B * n_pad * (6 * C + 48)),
        transcendentals=int(B * n_pad * (C + 3)),
        bytes_accessed=int(bytes_in + 4 * B * (n_pad + 128)),
    )

    neg_ce, stats = pl.pallas_call(
        kernel,
        out_shape=[
            jax.ShapeDtypeStruct((B, 1, n_pad), jnp.float32),   # negative CE per anchor
            jax.ShapeDtypeStruct((B, 1, 128), jnp.float32),     # packed per-item stats
        ],
        grid_spec=pltpu.PrefetchScalarGridSpec(
            num_scalar_prefetch=0,
            grid=(B, n_tiles),
            in_specs=[
                pl.BlockSpec((None, C, tile_n), lambda b, n: (b, 0, n)),
                pl.BlockSpec((None, 4, tile_n), lambda b, n: (b, 0, n)),
                pl.BlockSpec((None, 5, tile_n), lambda b, n: (b, 0, n)),
            ],
            out_specs=[
                pl.BlockSpec((None, 1, tile_n), lambda b, n: (b, 0, n)),
                pl.BlockSpec((None, 1, 128), lambda b, n: (b, 0, 0)),
            ],
            scratch_shapes=[pltpu.VMEM((1, tile_n), jnp.float32)] * 3,
        ),
        compiler_params=pltpu.CompilerParams(
            dimension_semantics=("parallel", "arbitrary"),
            vmem_limit_bytes=32 * 1024 * 1024,
        ),
        cost_estimate=cost,
    )(conf_t, loc_t, tgt_t)

    neg_ce = neg_ce[:, 0, :N]            # (B, N) -- drop lane padding
    pos_sum = stats[:, 0, 0]             # (B,)
    loc_sum = stats[:, 0, 1]
    nmatch = stats[:, 0, 2]

    # TODO(synk): hard-negative mining (descending sort + dynamic top-(3*num_matched)
    # prefix sum) stays in plain JAX -- no sort primitive in Pallas TPU.
    neg_sorted = -jnp.sort(-neg_ce, axis=1)                          # descending
    cums = jnp.concatenate(
        [jnp.zeros((B, 1), jnp.float32), jnp.cumsum(neg_sorted, axis=1)], axis=1)
    k = jnp.minimum(3 * nmatch.astype(jnp.int32), N)                 # [0:3k] truncation semantics
    neg_sum = jnp.take_along_axis(cums, k[:, None], axis=1)[:, 0]

    per_item_conf = pos_sum + neg_sum
    per_item_loss = per_item_conf + alpha * loc_sum

    num_hits = jnp.sum(nmatch)
    denom = jnp.where(num_hits > 0, num_hits, 1.0)
    batch_loss = jnp.where(num_hits > 0, jnp.sum(per_item_loss) / denom, 0.0)
    batch_conf = jnp.where(num_hits > 0, jnp.sum(per_item_conf) / denom, 0.0)
    batch_loc = jnp.where(num_hits > 0, jnp.sum(loc_sum) / denom, 0.0)
    return batch_loss, {"conf": batch_conf, "loc": batch_loc}


if __name__ == "__main__":
    # Note: iou_threshold / data_encoder from __init__ are not used in forward().
    B, N, C = 2, 300, 8          # batch, anchors, classes (class 0 = background)
    alpha = 1.0

    key = jax.random.PRNGKey(0)
    k_conf, k_loc1, k_loc2, k_tgt1, k_tgt2, k_cls = jax.random.split(key, 6)

    confidences = jax.random.normal(k_conf, (B, N, C), dtype=jnp.float32)

    # predicted boxes (x1, y1, x2, y2) with x2 > x1, y2 > y1
    p_xy1 = jax.random.uniform(k_loc1, (B, N, 2), minval=0.0, maxval=0.5)
    p_wh = jax.random.uniform(k_loc2, (B, N, 2), minval=0.1, maxval=0.5)
    localizations = jnp.concatenate([p_xy1, p_xy1 + p_wh], axis=-1).astype(jnp.float32)

    # target boxes + class id in last column (0 => no object)
    t_xy1 = jax.random.uniform(k_tgt1, (B, N, 2), minval=0.0, maxval=0.5)
    t_wh = jax.random.uniform(k_tgt2, (B, N, 2), minval=0.1, maxval=0.5)
    t_cls = jax.random.randint(k_cls, (B, N, 1), 0, C).astype(jnp.float32)
    targets = jnp.concatenate([t_xy1, t_xy1 + t_wh, t_cls], axis=-1).astype(jnp.float32)

    # small tile so the multi-tile accumulator path is exercised (3 N-tiles here)
    loss, breakdown = ssd_loss(confidences, localizations, targets, alpha=alpha, tile_n=128)
    jax.block_until_ready(loss)
    jax.block_until_ready(breakdown["conf"])
    jax.block_until_ready(breakdown["loc"])
    print("KERNEL_OK")
</pallas_src>

<mosaic_0001>
module attributes {stable_mosaic.version = 11 : i64} {
  func.func @_ssd_loss_kernel(%arg0: i32, %arg1: i32, %arg2: memref<1x8x128xf32, #tpu.memory_space<vmem>>, %arg3: memref<1x4x128xf32, #tpu.memory_space<vmem>>, %arg4: memref<1x5x128xf32, #tpu.memory_space<vmem>>, %arg5: memref<1x1x128xf32, #tpu.memory_space<vmem>>, %arg6: memref<1x1x128xf32, #tpu.memory_space<vmem>>, %arg7: memref<1x128xf32, #tpu.memory_space<vmem>>, %arg8: memref<1x128xf32, #tpu.memory_space<vmem>>, %arg9: memref<1x128xf32, #tpu.memory_space<vmem>>) attributes {dimension_semantics = [#tpu.dimension_semantics<parallel>, #tpu.dimension_semantics<arbitrary>], iteration_bounds = array<i64: 2, 3>, scalar_prefetch = 0 : i64, scratch_operands = 3 : i64, tpu.core_type = #tpu.core_type<tc>, window_params = [{transform_indices = @transform_0, window_bounds = array<i64: 1, 8, 128>}, {transform_indices = @transform_1, window_bounds = array<i64: 1, 4, 128>}, {transform_indices = @transform_2, window_bounds = array<i64: 1, 5, 128>}, {transform_indices = @transform_3, window_bounds = array<i64: 1, 1, 128>}, {transform_indices = @transform_4, window_bounds = array<i64: 1, 1, 128>}]} {
    %c0_i32 = arith.constant 0 : i32
    %0 = arith.cmpi eq, %arg1, %c0_i32 : i32
    %1 = arith.extui %0 : i1 to i32
    %c0_i32_0 = arith.constant 0 : i32
    %2 = arith.cmpi ne, %1, %c0_i32_0 : i32
    scf.if %2 {
      %cst_34 = arith.constant 0.000000e+00 : f32
      %174 = vector.broadcast %cst_34 : f32 to vector<1x128xf32>
      %c0_35 = arith.constant 0 : index
      %c0_36 = arith.constant 0 : index
      %175 = vector.load %arg7[%c0_35, %c0_36] : memref<1x128xf32, #tpu.memory_space<vmem>>, vector<1x128xf32>
      tpu.vector_store %arg7[%c0_35, %c0_36], %174 {strides = array<i32>} : memref<1x128xf32, #tpu.memory_space<vmem>>, vector<1x128xf32>,
      %cst_37 = arith.constant 0.000000e+00 : f32
      %176 = vector.broadcast %cst_37 : f32 to vector<1x128xf32>
      %c0_38 = arith.constant 0 : index
      %c0_39 = arith.constant 0 : index
      %177 = vector.load %arg8[%c0_38, %c0_39] : memref<1x128xf32, #tpu.memory_space<vmem>>, vector<1x128xf32>
      tpu.vector_store %arg8[%c0_38, %c0_39], %176 {strides = array<i32>} : memref<1x128xf32, #tpu.memory_space<vmem>>, vector<1x128xf32>,
      %cst_40 = arith.constant 0.000000e+00 : f32
      %178 = vector.broadcast %cst_40 : f32 to vector<1x128xf32>
      %c0_41 = arith.constant 0 : index
      %c0_42 = arith.constant 0 : index
      %179 = vector.load %arg9[%c0_41, %c0_42] : memref<1x128xf32, #tpu.memory_space<vmem>>, vector<1x128xf32>
      tpu.vector_store %arg9[%c0_41, %c0_42], %178 {strides = array<i32>} : memref<1x128xf32, #tpu.memory_space<vmem>>, vector<1x128xf32>,
    } else {
    }
    %c0 = arith.constant 0 : index
    %c0_1 = arith.constant 0 : index
    %c0_2 = arith.constant 0 : index
    %3 = vector.load %arg2[%c0, %c0_1, %c0_2] : memref<1x8x128xf32, #tpu.memory_space<vmem>>, vector<1x8x128xf32>
    %4 = vector.shape_cast %3 : vector<1x8x128xf32> to vector<8x128xf32>
    %c0_3 = arith.constant 0 : index
    %c0_4 = arith.constant 0 : index
    %c0_5 = arith.constant 0 : index
    %5 = vector.load %arg3[%c0_3, %c0_4, %c0_5] : memref<1x4x128xf32, #tpu.memory_space<vmem>>, vector<1x4x128xf32>
    %6 = vector.shape_cast %5 : vector<1x4x128xf32> to vector<4x128xf32>
    %c0_6 = arith.constant 0 : index
    %c0_7 = arith.constant 0 : index
    %c0_8 = arith.constant 0 : index
    %7 = vector.load %arg4[%c0_6, %c0_7, %c0_8] : memref<1x5x128xf32, #tpu.memory_space<vmem>>, vector<1x5x128xf32>
    %8 = vector.shape_cast %7 : vector<1x5x128xf32> to vector<5x128xf32>
    %9 = tpu.iota {dimensions = array<i32: 1>} : vector<1x128xi32>
    %c128_i32 = arith.constant 128 : i32
    %10 = arith.muli %arg1, %c128_i32 : i32
    %11 = vector.broadcast %10 : i32 to vector<1x128xi32>
    %12 = arith.addi %11, %9 : vector<1x128xi32>
    %c300_i32 = arith.constant 300 : i32
    %13 = vector.broadcast %c300_i32 : i32 to vector<1x128xi32>
    %14 = arith.cmpi slt, %12, %13 : vector<1x128xi32>
    %15 = vector.extract_strided_slice %8 {offsets = [4, 0], sizes = [1, 128], strides = [1, 1]} : vector<5x128xf32> to vector<1x128xf32>
    %16 = arith.fptosi %15 : vector<1x128xf32> to vector<1x128xi32>
    %c0_i32_9 = arith.constant 0 : i32
    %17 = vector.broadcast %c0_i32_9 : i32 to vector<1x128xi32>
    %18 = arith.cmpi sgt, %16, %17 : vector<1x128xi32>
    %19 = arith.andi %18, %14 : vector<1x128xi1>
    %20 = arith.extui %19 : vector<1x128xi1> to vector<1x128xi32>
    %21 = arith.sitofp %20 : vector<1x128xi32> to vector<1x128xf32>
    %c0_i32_10 = arith.constant 0 : i32
    %22 = vector.broadcast %c0_i32_10 : i32 to vector<1x128xi32>
    %23 = arith.cmpi eq, %16, %22 : vector<1x128xi32>
    %24 = arith.andi %23, %14 : vector<1x128xi1>
    %25 = arith.extui %24 : vector<1x128xi1> to vector<1x128xi32>
    %26 = arith.sitofp %25 : vector<1x128xi32> to vector<1x128xf32>
    %27 = vector.extract_strided_slice %4 {offsets = [0, 0], sizes = [1, 128], strides = [1, 1]} : vector<8x128xf32> to vector<1x128xf32>
    %28 = vector.extract_strided_slice %4 {offsets = [1, 0], sizes = [1, 128], strides = [1, 1]} : vector<8x128xf32> to vector<1x128xf32>
    %29 = arith.maximumf %27, %28 : vector<1x128xf32>
    %30 = vector.extract_strided_slice %4 {offsets = [2, 0], sizes = [1, 128], strides = [1, 1]} : vector<8x128xf32> to vector<1x128xf32>
    %31 = arith.maximumf %29, %30 : vector<1x128xf32>
    %32 = vector.extract_strided_slice %4 {offsets = [3, 0], sizes = [1, 128], strides = [1, 1]} : vector<8x128xf32> to vector<1x128xf32>
    %33 = arith.maximumf %31, %32 : vector<1x128xf32>
    %34 = vector.extract_strided_slice %4 {offsets = [4, 0], sizes = [1, 128], strides = [1, 1]} : vector<8x128xf32> to vector<1x128xf32>
    %35 = arith.maximumf %33, %34 : vector<1x128xf32>
    %36 = vector.extract_strided_slice %4 {offsets = [5, 0], sizes = [1, 128], strides = [1, 1]} : vector<8x128xf32> to vector<1x128xf32>
    %37 = arith.maximumf %35, %36 : vector<1x128xf32>
    %38 = vector.extract_strided_slice %4 {offsets = [6, 0], sizes = [1, 128], strides = [1, 1]} : vector<8x128xf32> to vector<1x128xf32>
    %39 = arith.maximumf %37, %38 : vector<1x128xf32>
    %40 = vector.extract_strided_slice %4 {offsets = [7, 0], sizes = [1, 128], strides = [1, 1]} : vector<8x128xf32> to vector<1x128xf32>
    %41 = arith.maximumf %39, %40 : vector<1x128xf32>
    %cst = arith.constant 0.000000e+00 : f32
    %42 = vector.broadcast %cst : f32 to vector<1x128xf32>
    %43 = vector.extract_strided_slice %4 {offsets = [0, 0], sizes = [1, 128], strides = [1, 1]} : vector<8x128xf32> to vector<1x128xf32>
    %44 = arith.subf %43, %41 : vector<1x128xf32>
    %45 = math.exp %44 : vector<1x128xf32>
    %46 = arith.addf %42, %45 : vector<1x128xf32>
    %47 = vector.extract_strided_slice %4 {offsets = [1, 0], sizes = [1, 128], strides = [1, 1]} : vector<8x128xf32> to vector<1x128xf32>
    %48 = arith.subf %47, %41 : vector<1x128xf32>
    %49 = math.exp %48 : vector<1x128xf32>
    %50 = arith.addf %46, %49 : vector<1x128xf32>
    %51 = vector.extract_strided_slice %4 {offsets = [2, 0], sizes = [1, 128], strides = [1, 1]} : vector<8x128xf32> to vector<1x128xf32>
    %52 = arith.subf %51, %41 : vector<1x128xf32>
    %53 = math.exp %52 : vector<1x128xf32>
    %54 = arith.addf %50, %53 : vector<1x128xf32>
    %55 = vector.extract_strided_slice %4 {offsets = [3, 0], sizes = [1, 128], strides = [1, 1]} : vector<8x128xf32> to vector<1x128xf32>
    %56 = arith.subf %55, %41 : vector<1x128xf32>
    %57 = math.exp %56 : vector<1x128xf32>
    %58 = arith.addf %54, %57 : vector<1x128xf32>
    %59 = vector.extract_strided_slice %4 {offsets = [4, 0], sizes = [1, 128], strides = [1, 1]} : vector<8x128xf32> to vector<1x128xf32>
    %60 = arith.subf %59, %41 : vector<1x128xf32>
    %61 = math.exp %60 : vector<1x128xf32>
    %62 = arith.addf %58, %61 : vector<1x128xf32>
    %63 = vector.extract_strided_slice %4 {offsets = [5, 0], sizes = [1, 128], strides = [1, 1]} : vector<8x128xf32> to vector<1x128xf32>
    %64 = arith.subf %63, %41 : vector<1x128xf32>
    %65 = math.exp %64 : vector<1x128xf32>
    %66 = arith.addf %62, %65 : vector<1x128xf32>
    %67 = vector.extract_strided_slice %4 {offsets = [6, 0], sizes = [1, 128], strides = [1, 1]} : vector<8x128xf32> to vector<1x128xf32>
    %68 = arith.subf %67, %41 : vector<1x128xf32>
    %69 = math.exp %68 : vector<1x128xf32>
    %70 = arith.addf %66, %69 : vector<1x128xf32>
    %71 = vector.extract_strided_slice %4 {offsets = [7, 0], sizes = [1, 128], strides = [1, 1]} : vector<8x128xf32> to vector<1x128xf32>
    %72 = arith.subf %71, %41 : vector<1x128xf32>
    %73 = math.exp %72 : vector<1x128xf32>
    %74 = arith.addf %70, %73 : vector<1x128xf32>
    %75 = math.log %74 : vector<1x128xf32>
    %76 = arith.addf %41, %75 : vector<1x128xf32>
    %c1_i32 = arith.constant 1 : i32
    %77 = vector.broadcast %c1_i32 : i32 to vector<1x128xi32>
    %78 = arith.cmpi eq, %16, %77 : vector<1x128xi32>
    %79 = vector.extract_strided_slice %4 {offsets = [1, 0], sizes = [1, 128], strides = [1, 1]} : vector<8x128xf32> to vector<1x128xf32>
    %80 = arith.select %78, %79, %27 : vector<1x128xi1>, vector<1x128xf32>
    %c2_i32 = arith.constant 2 : i32
    %81 = vector.broadcast %c2_i32 : i32 to vector<1x128xi32>
    %82 = arith.cmpi eq, %16, %81 : vector<1x128xi32>
    %83 = vector.extract_strided_slice %4 {offsets = [2, 0], sizes = [1, 128], strides = [1, 1]} : vector<8x128xf32> to vector<1x128xf32>
    %84 = arith.select %82, %83, %80 : vector<1x128xi1>, vector<1x128xf32>
    %c3_i32 = arith.constant 3 : i32
    %85 = vector.broadcast %c3_i32 : i32 to vector<1x128xi32>
    %86 = arith.cmpi eq, %16, %85 : vector<1x128xi32>
    %87 = vector.extract_strided_slice %4 {offsets = [3, 0], sizes = [1, 128], strides = [1, 1]} : vector<8x128xf32> to vector<1x128xf32>
    %88 = arith.select %86, %87, %84 : vector<1x128xi1>, vector<1x128xf32>
    %c4_i32 = arith.constant 4 : i32
    %89 = vector.broadcast %c4_i32 : i32 to vector<1x128xi32>
    %90 = arith.cmpi eq, %16, %89 : vector<1x128xi32>
    %91 = vector.extract_strided_slice %4 {offsets = [4, 0], sizes = [1, 128], strides = [1, 1]} : vector<8x128xf32> to vector<1x128xf32>
    %92 = arith.select %90, %91, %88 : vector<1x128xi1>, vector<1x128xf32>
    %c5_i32 = arith.constant 5 : i32
    %93 = vector.broadcast %c5_i32 : i32 to vector<1x128xi32>
    %94 = arith.cmpi eq, %16, %93 : vector<1x128xi32>
    %95 = vector.extract_strided_slice %4 {offsets = [5, 0], sizes = [1, 128], strides = [1, 1]} : vector<8x128xf32> to vector<1x128xf32>
    %96 = arith.select %94, %95, %92 : vector<1x128xi1>, vector<1x128xf32>
    %c6_i32 = arith.constant 6 : i32
    %97 = vector.broadcast %c6_i32 : i32 to vector<1x128xi32>
    %98 = arith.cmpi eq, %16, %97 : vector<1x128xi32>
    %99 = vector.extract_strided_slice %4 {offsets = [6, 0], sizes = [1, 128], strides = [1, 1]} : vector<8x128xf32> to vector<1x128xf32>
    %100 = arith.select %98, %99, %96 : vector<1x128xi1>, vector<1x128xf32>
    %c7_i32 = arith.constant 7 : i32
    %101 = vector.broadcast %c7_i32 : i32 to vector<1x128xi32>
    %102 = arith.cmpi eq, %16, %101 : vector<1x128xi32>
    %103 = vector.extract_strided_slice %4 {offsets = [7, 0], sizes = [1, 128], strides = [1, 1]} : vector<8x128xf32> to vector<1x128xf32>
    %104 = arith.select %102, %103, %100 : vector<1x128xi1>, vector<1x128xf32>
    %105 = arith.subf %76, %104 : vector<1x128xf32>
    %106 = arith.subf %76, %27 : vector<1x128xf32>
    %107 = arith.mulf %26, %106 : vector<1x128xf32>
    %c0_11 = arith.constant 0 : index
    %c0_12 = arith.constant 0 : index
    %c0_13 = arith.constant 0 : index
    %108 = vector.load %arg5[%c0_11, %c0_12, %c0_13] : memref<1x1x128xf32, #tpu.memory_space<vmem>>, vector<1x1x128xf32>
    %109 = vector.shape_cast %108 : vector<1x1x128xf32> to vector<1x128xf32>
    %110 = vector.shape_cast %107 : vector<1x128xf32> to vector<1x1x128xf32>
    tpu.vector_store %arg5[%c0_11, %c0_12, %c0_13], %110 {strides = array<i32>} : memref<1x1x128xf32, #tpu.memory_space<vmem>>, vector<1x1x128xf32>,
    %111 = vector.extract_strided_slice %6 {offsets = [0, 0], sizes = [1, 128], strides = [1, 1]} : vector<4x128xf32> to vector<1x128xf32>
    %112 = vector.extract_strided_slice %6 {offsets = [1, 0], sizes = [1, 128], strides = [1, 1]} : vector<4x128xf32> to vector<1x128xf32>
    %113 = vector.extract_strided_slice %6 {offsets = [2, 0], sizes = [1, 128], strides = [1, 1]} : vector<4x128xf32> to vector<1x128xf32>
    %114 = vector.extract_strided_slice %6 {offsets = [3, 0], sizes = [1, 128], strides = [1, 1]} : vector<4x128xf32> to vector<1x128xf32>
    %115 = vector.extract_strided_slice %8 {offsets = [0, 0], sizes = [1, 128], strides = [1, 1]} : vector<5x128xf32> to vector<1x128xf32>
    %116 = vector.extract_strided_slice %8 {offsets = [1, 0], sizes = [1, 128], strides = [1, 1]} : vector<5x128xf32> to vector<1x128xf32>
    %117 = vector.extract_strided_slice %8 {offsets = [2, 0], sizes = [1, 128], strides = [1, 1]} : vector<5x128xf32> to vector<1x128xf32>
    %118 = vector.extract_strided_slice %8 {offsets = [3, 0], sizes = [1, 128], strides = [1, 1]} : vector<5x128xf32> to vector<1x128xf32>
    %119 = arith.maximumf %111, %115 : vector<1x128xf32>
    %120 = arith.maximumf %112, %116 : vector<1x128xf32>
    %121 = arith.minimumf %113, %117 : vector<1x128xf32>
    %122 = arith.minimumf %114, %118 : vector<1x128xf32>
    %123 = arith.subf %121, %119 : vector<1x128xf32>
    %124 = arith.subf %122, %120 : vector<1x128xf32>
    %cst_14 = arith.constant 0.000000e+00 : f32
    %125 = vector.broadcast %cst_14 : f32 to vector<1x128xf32>
    %126 = arith.cmpf ogt, %123, %125 : vector<1x128xf32>
    %cst_15 = arith.constant 0.000000e+00 : f32
    %127 = vector.broadcast %cst_15 : f32 to vector<1x128xf32>
    %128 = arith.cmpf ogt, %124, %127 : vector<1x128xf32>
    %129 = arith.andi %126, %128 : vector<1x128xi1>
    %130 = arith.mulf %123, %124 : vector<1x128xf32>
    %cst_16 = arith.constant 0.000000e+00 : f32
    %131 = vector.broadcast %cst_16 : f32 to vector<1x128xf32>
    %132 = arith.select %129, %130, %131 : vector<1x128xi1>, vector<1x128xf32>
    %133 = arith.subf %113, %111 : vector<1x128xf32>
    %134 = arith.subf %114, %112 : vector<1x128xf32>
    %135 = arith.mulf %133, %134 : vector<1x128xf32>
    %136 = arith.subf %117, %115 : vector<1x128xf32>
    %137 = arith.subf %118, %116 : vector<1x128xf32>
    %138 = arith.mulf %136, %137 : vector<1x128xf32>
    %139 = arith.addf %135, %138 : vector<1x128xf32>
    %140 = arith.subf %139, %132 : vector<1x128xf32>
    %cst_17 = arith.constant 1.000000e-07 : f32
    %141 = vector.broadcast %cst_17 : f32 to vector<1x128xf32>
    %142 = arith.addf %140, %141 : vector<1x128xf32>
    %143 = tpu.reciprocal %142 {approx = true} : vector<1x128xf32> -> vector<1x128xf32>
    %144 = arith.mulf %132, %143 : vector<1x128xf32>
    %145 = arith.minimumf %111, %115 : vector<1x128xf32>
    %146 = arith.minimumf %112, %116 : vector<1x128xf32>
    %147 = arith.maximumf %113, %117 : vector<1x128xf32>
    %148 = arith.maximumf %114, %118 : vector<1x128xf32>
    %149 = arith.subf %147, %145 : vector<1x128xf32>
    %150 = arith.subf %148, %146 : vector<1x128xf32>
    %151 = arith.mulf %149, %150 : vector<1x128xf32>
    %152 = arith.subf %151, %140 : vector<1x128xf32>
    %cst_18 = arith.constant 1.000000e-07 : f32
    %153 = vector.broadcast %cst_18 : f32 to vector<1x128xf32>
    %154 = arith.addf %151, %153 : vector<1x128xf32>
    %155 = tpu.reciprocal %154 {approx = true} : vector<1x128xf32> -> vector<1x128xf32>
    %156 = arith.mulf %152, %155 : vector<1x128xf32>
    %157 = arith.subf %144, %156 : vector<1x128xf32>
    %cst_19 = arith.constant 1.000000e+00 : f32
    %158 = vector.broadcast %cst_19 : f32 to vector<1x128xf32>
    %159 = arith.subf %158, %157 : vector<1x128xf32>
    %c0_20 = arith.constant 0 : index
    %c0_21 = arith.constant 0 : index
    %160 = vector.load %arg7[%c0_20, %c0_21] : memref<1x128xf32, #tpu.memory_space<vmem>>, vector<1x128xf32>
    %161 = arith.mulf %21, %105 : vector<1x128xf32>
    %162 = arith.addf %160, %161 : vector<1x128xf32>
    %c0_22 = arith.constant 0 : index
    %c0_23 = arith.constant 0 : index
    %163 = vector.load %arg7[%c0_22, %c0_23] : memref<1x128xf32, #tpu.memory_space<vmem>>, vector<1x128xf32>
    tpu.vector_store %arg7[%c0_22, %c0_23], %162 {strides = array<i32>} : memref<1x128xf32, #tpu.memory_space<vmem>>, vector<1x128xf32>,
    %c0_24 = arith.constant 0 : index
    %c0_25 = arith.constant 0 : index
    %164 = vector.load %arg8[%c0_24, %c0_25] : memref<1x128xf32, #tpu.memory_space<vmem>>, vector<1x128xf32>
    %165 = arith.mulf %21, %159 : vector<1x128xf32>
    %166 = arith.addf %164, %165 : vector<1x128xf32>
    %c0_26 = arith.constant 0 : index
    %c0_27 = arith.constant 0 : index
    %167 = vector.load %arg8[%c0_26, %c0_27] : memref<1x128xf32, #tpu.memory_space<vmem>>, vector<1x128xf32>
    tpu.vector_store %arg8[%c0_26, %c0_27], %166 {strides = array<i32>} : memref<1x128xf32, #tpu.memory_space<vmem>>, vector<1x128xf32>,
    %c0_28 = arith.constant 0 : index
    %c0_29 = arith.constant 0 : index
    %168 = vector.load %arg9[%c0_28, %c0_29] : memref<1x128xf32, #tpu.memory_space<vmem>>, vector<1x128xf32>
    %169 = arith.addf %168, %21 : vector<1x128xf32>
    %c0_30 = arith.constant 0 : index
    %c0_31 = arith.constant 0 : index
    %170 = vector.load %arg9[%c0_30, %c0_31] : memref<1x128xf32, #tpu.memory_space<vmem>>, vector<1x128xf32>
    tpu.vector_store %arg9[%c0_30, %c0_31], %169 {strides = array<i32>} : memref<1x128xf32, #tpu.memory_space<vmem>>, vector<1x128xf32>,
    %c2_i32_32 = arith.constant 2 : i32
    %171 = arith.cmpi eq, %arg1, %c2_i32_32 : i32
    %172 = arith.extui %171 : i1 to i32
    %c0_i32_33 = arith.constant 0 : i32
    %173 = arith.cmpi ne, %172, %c0_i32_33 : i32
    scf.if %173 {
      %c0_34 = arith.constant 0 : index
      %c0_35 = arith.constant 0 : index
      %174 = vector.load %arg7[%c0_34, %c0_35] : memref<1x128xf32, #tpu.memory_space<vmem>>, vector<1x128xf32>
      %175 = vector.shape_cast %174 : vector<1x128xf32> to vector<1x1x128xf32>
      %cst_36 = arith.constant dense<0.000000e+00> : vector<1xf32>
      %176 = vector.multi_reduction <add>, %175, %cst_36 [1, 2] : vector<1x1x128xf32> to vector<1xf32>
      %177 = vector.shape_cast %176 : vector<1xf32> to vector<1x1x1xf32>
      %178 = vector.extract %177[0, 0, 0] : f32 from vector<1x1x1xf32>
      %c0_37 = arith.constant 0 : index
      %c0_38 = arith.constant 0 : index
      %179 = vector.load %arg8[%c0_37, %c0_38] : memref<1x128xf32, #tpu.memory_space<vmem>>, vector<1x128xf32>
      %180 = vector.shape_cast %179 : vector<1x128xf32> to vector<1x1x128xf32>
      %cst_39 = arith.constant dense<0.000000e+00> : vector<1xf32>
      %181 = vector.multi_reduction <add>, %180, %cst_39 [1, 2] : vector<1x1x128xf32> to vector<1xf32>
      %182 = vector.shape_cast %181 : vector<1xf32> to vector<1x1x1xf32>
      %183 = vector.extract %182[0, 0, 0] : f32 from vector<1x1x1xf32>
      %c0_40 = arith.constant 0 : index
      %c0_41 = arith.constant 0 : index
      %184 = vector.load %arg9[%c0_40, %c0_41] : memref<1x128xf32, #tpu.memory_space<vmem>>, vector<1x128xf32>
      %185 = vector.shape_cast %184 : vector<1x128xf32> to vector<1x1x128xf32>
      %cst_42 = arith.constant dense<0.000000e+00> : vector<1xf32>
      %186 = vector.multi_reduction <add>, %185, %cst_42 [1, 2] : vector<1x1x128xf32> to vector<1xf32>
      %187 = vector.shape_cast %186 : vector<1xf32> to vector<1x1x1xf32>
      %188 = vector.extract %187[0, 0, 0] : f32 from vector<1x1x1xf32>
      %189 = tpu.iota {dimensions = array<i32: 1>} : vector<1x128xi32>
      %c0_i32_43 = arith.constant 0 : i32
      %190 = vector.broadcast %c0_i32_43 : i32 to vector<1x128xi32>
      %191 = arith.cmpi eq, %189, %190 : vector<1x128xi32>
      %c1_i32_44 = arith.constant 1 : i32
      %192 = vector.broadcast %c1_i32_44 : i32 to vector<1x128xi32>
      %193 = arith.cmpi eq, %189, %192 : vector<1x128xi32>
      %c2_i32_45 = arith.constant 2 : i32
      %194 = vector.broadcast %c2_i32_45 : i32 to vector<1x128xi32>
      %195 = arith.cmpi eq, %189, %194 : vector<1x128xi32>
      %cst_46 = arith.constant 0.000000e+00 : f32
      %196 = vector.broadcast %188 : f32 to vector<1x128xf32>
      %197 = vector.broadcast %cst_46 : f32 to vector<1x128xf32>
      %198 = arith.select %195, %196, %197 : vector<1x128xi1>, vector<1x128xf32>
      %199 = vector.broadcast %183 : f32 to vector<1x128xf32>
      %200 = arith.select %193, %199, %198 : vector<1x128xi1>, vector<1x128xf32>
      %201 = vector.broadcast %178 : f32 to vector<1x128xf32>
      %202 = arith.select %191, %201, %200 : vector<1x128xi1>, vector<1x128xf32>
      %c0_47 = arith.constant 0 : index
      %c0_48 = arith.constant 0 : index
      %c0_49 = arith.constant 0 : index
      %203 = vector.load %arg6[%c0_47, %c0_48, %c0_49] : memref<1x1x128xf32, #tpu.memory_space<vmem>>, vector<1x1x128xf32>
      %204 = vector.shape_cast %203 : vector<1x1x128xf32> to vector<1x128xf32>
      %205 = vector.shape_cast %202 : vector<1x128xf32> to vector<1x1x128xf32>
      tpu.vector_store %arg6[%c0_47, %c0_48, %c0_49], %205 {strides = array<i32>} : memref<1x1x128xf32, #tpu.memory_space<vmem>>, vector<1x1x128xf32>,
    } else {
    }
    return
  }
  func.func @transform_0(%arg0: i32, %arg1: i32) -> (i32, i32, i32) {
    %c0_i32 = arith.constant 0 : i32
    %c0_i32_0 = arith.constant 0 : i32
    return %arg0, %c0_i32, %arg1 : i32, i32, i32
  }
  func.func @transform_1(%arg0: i32, %arg1: i32) -> (i32, i32, i32) {
    %c0_i32 = arith.constant 0 : i32
    %c0_i32_0 = arith.constant 0 : i32
    return %arg0, %c0_i32, %arg1 : i32, i32, i32
  }
  func.func @transform_2(%arg0: i32, %arg1: i32) -> (i32, i32, i32) {
    %c0_i32 = arith.constant 0 : i32
    %c0_i32_0 = arith.constant 0 : i32
    return %arg0, %c0_i32, %arg1 : i32, i32, i32
  }
  func.func @transform_3(%arg0: i32, %arg1: i32) -> (i32, i32, i32) {
    %c0_i32 = arith.constant 0 : i32
    %c0_i32_0 = arith.constant 0 : i32
    return %arg0, %c0_i32, %arg1 : i32, i32, i32
  }
  func.func @transform_4(%arg0: i32, %arg1: i32) -> (i32, i32, i32) {
    %c0_i32 = arith.constant 0 : i32
    %c0_i32_0 = arith.constant 0 : i32
    %c0_i32_1 = arith.constant 0 : i32
    return %arg0, %c0_i32, %c0_i32_0 : i32, i32, i32
  }
}

</mosaic_0001>

<llo_original>
// kernel: tpu_custom_call.1
$region0: #{tpu_custom_call.1}
  #allocation0 [shape = 'u32[]', space=smem, size = 0x4, offset = 0x4, fixed_abs, tag = 'smem constant byte address 0x4 - core index']
  #allocation1 [shape = 'u32[144,128]{1,0:T(1,128)}', space=vmem, size = 0x12000, scoped, tag = 'internal scratch']
  #allocation2 [shape = 'f32[1,128]{1,0:T(1,128)}', space=vmem, size = 0x200, scoped, tag = 'scratch operand']
  #allocation3 [shape = 'f32[1,128]{1,0:T(1,128)}', space=vmem, size = 0x200, scoped, tag = 'scratch operand']
  #allocation4 [shape = 'f32[1,128]{1,0:T(1,128)}', space=vmem, size = 0x200, scoped, tag = 'scratch operand']
  %s0 = inlined_call_operand.vmem [shape: f32[2,8,384], index: 0, kind: input, shape index: {}]
  %s1 = inlined_call_operand.vmem [shape: f32[2,4,384], index: 1, kind: input, shape index: {}]
  %s2 = inlined_call_operand.vmem [shape: f32[2,5,384], index: 2, kind: input, shape index: {}]
  %s3 = inlined_call_operand.hbm [shape: f32[2,1,384], index: 3, kind: output, shape index: {0}]
  %s4 = inlined_call_operand.hbm [shape: f32[2,1,128], index: 4, kind: output, shape index: {1}]
  %5 = xla_tuple %s3, %s4
  %s6 = sld [smem:[#allocation0]]
  $region61: #{tpu_custom_call.1} parent=0
    _
  %s8 = ssub.s32 1, %s6
  %s9 = scalar_select 0, %s8, %s6
  $region1: #{tpu_custom_call.1} parent=0
    #allocation5 [shape = 'u8[1024]{0}', space=vmem, size = 0x400, scoped, tag = 'output window, operand 0']
    #allocation6 [shape = 's32[2]{0}', space=sflag, size = 0x8, scoped, tag = 'scoped memory for tpu_custom_call.1']
    #allocation7 [shape = 'u8[1024]{0}', space=vmem, size = 0x400, scoped, tag = 'output window, operand 1']
    #allocation8 [shape = 's32[2]{0}', space=sflag, size = 0x8, scoped, tag = 'scoped memory for tpu_custom_call.1']
    %10 = vsyncpa [#allocation6], 0
    %s11 = scalar_lea.sflag [#allocation6], 1
    %12 = vsyncpa %s11, 0
    %13 = vsyncpa [#allocation8], 0
    %s14 = scalar_lea.sflag [#allocation8], 1
    %15 = vsyncpa %s14, 0
    loop: start=0, step=1, limit=8
    $region2: #{tpu_custom_call.1} parent=1 // loop_pre_header
      _
    $region3: #{tpu_custom_call.1} parent=1 // loop_header
      %s17 = sphi 0, %s21
      %p18 = scmp.ge.s32.totalorder %s17, 8
      %s24 = sphi 0, %s36
      %s25 = sphi 0, %s32
      %s26 = sphi 0, %s24
      %s27 = sphi 0, %s25
      %s28 = sphi 0, %s26
      %s29 = sphi 0, %s27
      %s41 = sphi 0, %s43
      %s44 = sphi 0, %s41
      %s45 = sphi 0, %s44
      %s61 = sphi 0, %s45
      %s69 = sphi 0, %s71
      %s72 = sphi 0, %s69
      %s73 = sphi 0, %s72
      %s89 = sphi 0, %s73
      %s97 = sphi 0, %s99
      %s100 = sphi 0, %s97
      %s101 = sphi 0, %s100
      %s117 = sphi 0, %s101
      %s125 = sphi 0, %s127
      %s128 = sphi 0, %s125
      %s129 = sphi 0, %s128
      %s145 = sphi 0, %s129
      %s151 = sphi 0, %s153
      %s154 = sphi 0, %s151
      %s155 = sphi 0, %s154
      %s171 = sphi 0, %s155
    $region4: #{tpu_custom_call.1} parent=1 // loop_header_branch
      %20 = sbr.rel (%p18) target = $region8
    $region5: #{tpu_custom_call.1} parent=1 // loop_body
      %s22 = ssub.s32 %s17, 1
      %s23 = ssub.s32 %s17, 2
      %s30 = sadd.s32 1, %s25
      %p31 = scmp.ge.s32.totalorder %s30, 3
      %s32 = scalar_select %p31, 0, %s30
      %s33 = sadd.s32 1, %s24
      %s34 = scalar_select %p31, %s33, %s24
      %p35 = scmp.ge.s32.totalorder %s34, 2
      %s36 = scalar_select %p35, 0, %s34
      %s37 = ssub.s32 %s24, %s36
      %s38 = ssub.s32 %s25, %s32
      %s39 = sor.u32 %s37, %s38
      %p40 = scmp.eq.s32.totalorder %s39, 0
      %s42 = sadd.s32 %s41, 1
      %s43 = scalar_select %p40, %s41, %s42
      %p46 = pneg %p40
      %p47 = scmp.eq.s32.totalorder %s17, 5
      %p48 = por %p46, %p47
      %p49 = scmp.ne.s32.totalorder %s41, %s44
      %p50 = scmp.eq.s32.totalorder %s17, 0
      %p51 = por %p49, %p50
      %p52 = scmp.ne.s32.totalorder %s41, %s44
      %p53 = scmp.eq.s32.totalorder %s22, 5
      %p54 = por %p52, %p53
      %p55 = scmp.ne.s32.totalorder %s44, %s45
      %p56 = scmp.eq.s32.totalorder %s22, 0
      %p57 = por %p55, %p56
      %p58 = scmp.ne.s32.totalorder %s44, %s45
      %p59 = scmp.eq.s32.totalorder %s23, 5
      %p60 = por %p58, %p59
      %p62 = scmp.ne.s32.totalorder %s45, %s61
      %p63 = scmp.eq.s32.totalorder %s23, 0
      %p64 = por %p62, %p63
      %s65 = ssub.s32 %s24, %s36
      %s66 = ssub.s32 %s25, %s32
      %s67 = sor.u32 %s65, %s66
      %p68 = scmp.eq.s32.totalorder %s67, 0
      %s70 = sadd.s32 %s69, 1
      %s71 = scalar_select %p68, %s69, %s70
      %p74 = pneg %p68
      %p75 = scmp.eq.s32.totalorder %s17, 5
      %p76 = por %p74, %p75
      %p77 = scmp.ne.s32.totalorder %s69, %s72
      %p78 = scmp.eq.s32.totalorder %s17, 0
      %p79 = por %p77, %p78
      %p80 = scmp.ne.s32.totalorder %s69, %s72
      %p81 = scmp.eq.s32.totalorder %s22, 5
      %p82 = por %p80, %p81
      %p83 = scmp.ne.s32.totalorder %s72, %s73
      %p84 = scmp.eq.s32.totalorder %s22, 0
      %p85 = por %p83, %p84
      %p86 = scmp.ne.s32.totalorder %s72, %s73
      %p87 = scmp.eq.s32.totalorder %s23, 5
      %p88 = por %p86, %p87
      %p90 = scmp.ne.s32.totalorder %s73, %s89
      %p91 = scmp.eq.s32.totalorder %s23, 0
      %p92 = por %p90, %p91
      %s93 = ssub.s32 %s24, %s36
      %s94 = ssub.s32 %s25, %s32
      %s95 = sor.u32 %s93, %s94
      %p96 = scmp.eq.s32.totalorder %s95, 0
      %s98 = sadd.s32 %s97, 1
      %s99 = scalar_select %p96, %s97, %s98
      %p102 = pneg %p96
      %p103 = scmp.eq.s32.totalorder %s17, 5
      %p104 = por %p102, %p103
      %p105 = scmp.ne.s32.totalorder %s97, %s100
      %p106 = scmp.eq.s32.totalorder %s17, 0
      %p107 = por %p105, %p106
      %p108 = scmp.ne.s32.totalorder %s97, %s100
      %p109 = scmp.eq.s32.totalorder %s22, 5
      %p110 = por %p108, %p109
      %p111 = scmp.ne.s32.totalorder %s100, %s101
      %p112 = scmp.eq.s32.totalorder %s22, 0
      %p113 = por %p111, %p112
      %p114 = scmp.ne.s32.totalorder %s100, %s101
      %p115 = scmp.eq.s32.totalorder %s23, 5
      %p116 = por %p114, %p115
      %p118 = scmp.ne.s32.totalorder %s101, %s117
      %p119 = scmp.eq.s32.totalorder %s23, 0
      %p120 = por %p118, %p119
      %s121 = ssub.s32 %s24, %s36
      %s122 = ssub.s32 %s25, %s32
      %s123 = sor.u32 %s121, %s122
      %p124 = scmp.eq.s32.totalorder %s123, 0
      %s126 = sadd.s32 %s125, 1
      %s127 = scalar_select %p124, %s125, %s126
      %p130 = pneg %p124
      %p131 = scmp.eq.s32.totalorder %s17, 5
      %p132 = por %p130, %p131
      %p133 = scmp.ne.s32.totalorder %s125, %s128
      %p134 = scmp.eq.s32.totalorder %s17, 0
      %p135 = por %p133, %p134
      %p136 = scmp.ne.s32.totalorder %s125, %s128
      %p137 = scmp.eq.s32.totalorder %s22, 5
      %p138 = por %p136, %p137
      %p139 = scmp.ne.s32.totalorder %s128, %s129
      %p140 = scmp.eq.s32.totalorder %s22, 0
      %p141 = por %p139, %p140
      %p142 = scmp.ne.s32.totalorder %s128, %s129
      %p143 = scmp.eq.s32.totalorder %s23, 5
      %p144 = por %p142, %p143
      %p146 = scmp.ne.s32.totalorder %s129, %s145
      %p147 = scmp.eq.s32.totalorder %s23, 0
      %p148 = por %p146, %p147
      %s149 = ssub.s32 %s24, %s36
      %p150 = scmp.eq.s32.totalorder %s149, 0
      %s152 = sadd.s32 %s151, 1
      %s153 = scalar_select %p150, %s151, %s152
      %p156 = pneg %p150
      %p157 = scmp.eq.s32.totalorder %s17, 5
      %p158 = por %p156, %p157
      %p159 = scmp.ne.s32.totalorder %s151, %s154
      %p160 = scmp.eq.s32.totalorder %s17, 0
      %p161 = por %p159, %p160
      %p162 = scmp.ne.s32.totalorder %s151, %s154
      %p163 = scmp.eq.s32.totalorder %s22, 5
      %p164 = por %p162, %p163
      %p165 = scmp.ne.s32.totalorder %s154, %s155
      %p166 = scmp.eq.s32.totalorder %s22, 0
      %p167 = por %p165, %p166
      %p168 = scmp.ne.s32.totalorder %s154, %s155
      %p169 = scmp.eq.s32.totalorder %s23, 5
      %p170 = por %p168, %p169
      %p172 = scmp.ne.s32.totalorder %s155, %s171
      %p173 = scmp.eq.s32.totalorder %s23, 0
      %p174 = por %p172, %p173
      %p175 = scmp.le.s32.totalorder 1, %s17
      %p176 = scmp.lt.s32.totalorder %s17, 7
      %p177 = pnand %p175, %p176
      %p178 = pneg %p177
      // Predicated region
      $region9: #{tpu_custom_call.1} parent=5 // pred_check
        _
      $region10: #{tpu_custom_call.1} parent=5 // pred_check_branch
        %180 = sbr.rel (%p177) target = $region12
      $region11: #{tpu_custom_call.1} parent=5 // pred_region
        %s181 = ssub.s32 %s17, 1
      $region12: #{tpu_custom_call.1} parent=5 // pred_fallthru
        _
      %p182 = scmp.lt.s32.totalorder %s17, 6
      // Predicated region
      $region13: #{tpu_custom_call.1} parent=5 // pred_check
        %p183 = pneg %p182
      $region14: #{tpu_custom_call.1} parent=5 // pred_check_branch
        %185 = sbr.rel (%p183) target = $region16
      $region15: #{tpu_custom_call.1} parent=5 // pred_region
        // Predicated region
        $region17: #{tpu_custom_call.1} parent=15 // pred_check
          %p186 = pneg %p51
        $region18: #{tpu_custom_call.1} parent=15 // pred_check_branch
          %188 = sbr.rel (%p186) target = $region20
        $region19: #{tpu_custom_call.1} parent=15 // pred_region
          %p189 = scmp.lt.s32.totalorder %s24, 1
          %s190 = scalar_select %p189, %s24, 1
          %p191 = scmp.lt.s32.totalorder %s25, 2
          %s192 = scalar_select %p191, %s25, 2
          %s193 = smul.addr %s190, 3
          %s194 = sadd.s32 %s192, %s193
          %s195 = smul.addr %s194, 8
          %s196 = scalar_lea.vmem %s0, %s195
        $region20: #{tpu_custom_call.1} parent=15 // pred_fallthru
          _
        // Predicated region
        $region21: #{tpu_custom_call.1} parent=15 // pred_check
          %p197 = pneg %p79
        $region22: #{tpu_custom_call.1} parent=15 // pred_check_branch
          %199 = sbr.rel (%p197) target = $region24
        $region23: #{tpu_custom_call.1} parent=15 // pred_region
          %p200 = scmp.lt.s32.totalorder %s24, 1
          %s201 = scalar_select %p200, %s24, 1
          %p202 = scmp.lt.s32.totalorder %s25, 2
          %s203 = scalar_select %p202, %s25, 2
          %s204 = smul.addr %s201, 3
          %s205 = sadd.s32 %s203, %s204
          %s206 = smul.addr %s205, 4
          %s207 = scalar_lea.vmem %s1, %s206
        $region24: #{tpu_custom_call.1} parent=15 // pred_fallthru
          _
        // Predicated region
        $region25: #{tpu_custom_call.1} parent=15 // pred_check
          %p208 = pneg %p107
        $region26: #{tpu_custom_call.1} parent=15 // pred_check_branch
          %210 = sbr.rel (%p208) target = $region28
        $region27: #{tpu_custom_call.1} parent=15 // pred_region
          %p211 = scmp.lt.s32.totalorder %s24, 1
          %s212 = scalar_select %p211, %s24, 1
          %p213 = scmp.lt.s32.totalorder %s25, 2
          %s214 = scalar_select %p213, %s25, 2
          %s215 = smul.addr %s212, 3
          %s216 = sadd.s32 %s214, %s215
          %s217 = smul.addr %s216, 8
          %s218 = scalar_lea.vmem %s2, %s217
        $region28: #{tpu_custom_call.1} parent=15 // pred_fallthru
          _
      $region16: #{tpu_custom_call.1} parent=5 // pred_fallthru
        _
      %p219 = scmp.le.s32.totalorder 1, %s17
      %p220 = scmp.lt.s32.totalorder %s17, 7
      %p221 = pnand %p219, %p220
      %p222 = pneg %p221
      // Predicated region
      $region29: #{tpu_custom_call.1} parent=5 // pred_check
        _
      $region30: #{tpu_custom_call.1} parent=5 // pred_check_branch
        %224 = sbr.rel (%p221) target = $region32
      $region31: #{tpu_custom_call.1} parent=5 // pred_region
        %s225 = ssub.s32 %s17, 1
        %p226 = scmp.lt.s32.totalorder %s26, 1
        %s227 = scalar_select %p226, %s26, 1
        %p228 = scmp.lt.s32.totalorder %s27, 2
        %s229 = scalar_select %p228, %s27, 2
        %s230 = smul.addr %s227, 3
        %s231 = sadd.s32 %s229, %s230
        %s232 = smul.addr %s231, 8
        %s233 = scalar_lea.vmem %s0, %s232
        %p234 = pneg %p57
        %p235 = pneg %p54
        %p236 = scmp.lt.s32.totalorder %s26, 1
        %s237 = scalar_select %p236, %s26, 1
        %p238 = scmp.lt.s32.totalorder %s27, 2
        %s239 = scalar_select %p238, %s27, 2
        %s240 = smul.addr %s237, 3
        %s241 = sadd.s32 %s239, %s240
        %s242 = smul.addr %s241, 4
        %s243 = scalar_lea.vmem %s1, %s242
        %p244 = pneg %p85
        %p245 = pneg %p82
        %p246 = scmp.lt.s32.totalorder %s26, 1
        %s247 = scalar_select %p246, %s26, 1
        %p248 = scmp.lt.s32.totalorder %s27, 2
        %s249 = scalar_select %p248, %s27, 2
        %s250 = smul.addr %s247, 3
        %s251 = sadd.s32 %s249, %s250
        %s252 = smul.addr %s251, 8
        %s253 = scalar_lea.vmem %s2, %s252
        %p254 = pneg %p113
        %p255 = pneg %p110
        %p256 = pneg %p141
        %p257 = pneg %p138
        %s258 = sand.u32 %s128, 1
        %s259 = scalar_lea.sflag [#allocation6], %s258
        %s260 = sand.u32 %s128, 1
        %s261 = scalar_lea.vmem [#allocation5], %s260
        %p262 = pneg %p167
        %p263 = pneg %p164
        %s264 = sand.u32 %s154, 1
        %s265 = scalar_lea.sflag [#allocation8], %s264
        %s266 = sand.u32 %s154, 1
        %s267 = scalar_lea.vmem [#allocation7], %s266
        %p268 = scmp.lt.s32.totalorder %s26, 1
        %s269 = scalar_select %p268, %s26, 1
        %p270 = scmp.lt.s32.totalorder %s27, 2
        %s271 = scalar_select %p270, %s27, 2
        %s272 = smul.addr %s269, 3
        %s273 = sadd.s32 %s271, %s272
        %s274 = smul.addr %s273, 8
        %s275 = scalar_lea.vmem %s0, %s274
        %p276 = scmp.lt.s32.totalorder %s26, 1
        %s277 = scalar_select %p276, %s26, 1
        %p278 = scmp.lt.s32.totalorder %s27, 2
        %s279 = scalar_select %p278, %s27, 2
        %s280 = smul.addr %s277, 3
        %s281 = sadd.s32 %s279, %s280
        %s282 = smul.addr %s281, 4
        %s283 = scalar_lea.vmem %s1, %s282
        %p284 = scmp.lt.s32.totalorder %s26, 1
        %s285 = scalar_select %p284, %s26, 1
        %p286 = scmp.lt.s32.totalorder %s27, 2
        %s287 = scalar_select %p286, %s27, 2
        %s288 = smul.addr %s285, 3
        %s289 = sadd.s32 %s287, %s288
        %s290 = smul.addr %s289, 8
        %s291 = scalar_lea.vmem %s2, %s290
        %p292 = scmp.eq.s32.totalorder %s27, 0
        // Predicated region
        $region33: #{tpu_custom_call.1} parent=31 // pred_check
          %p293 = pneg %p292
        $region34: #{tpu_custom_call.1} parent=31 // pred_check_branch
          %295 = sbr.rel (%p293) target = $region36
        $region35: #{tpu_custom_call.1} parent=31 // pred_region
          %296 = vst [vmem:[#allocation2] sm:$0x1] 0.0
          %297 = vst [vmem:[#allocation3] sm:$0x1] 0.0
          %298 = vst [vmem:[#allocation4] sm:$0x1] 0.0
        $region36: #{tpu_custom_call.1} parent=31 // pred_fallthru
          _
        %v299 = vld [vmem:[%s275] sm:$0xff]
        %v300 = vld [vmem:[%s283] sm:$0xf]
        %v301 = vld [vmem:[%s291] sm:$0x1f]
        %v302 = vlaneseq
        %v303 = vand.u32 %v302, 127
        %s304 = smul.u32 %s27, 128
        %v305 = vstv %s304
        %v306 = vadd.s32 %v305, %v303
        %vm307 = vcmp.lt.s32.totalorder %v306, 300
        %v308 = vcvt.f32.s32.to.zero.pseudo %v301
        %vm309 = vcmp.gt.s32.totalorder %v308, 0
        %vm310 = vmand %vm309, %vm307
        %v311 = vsel %vm310, 1, 0
        %v312 = vcvt.s32.f32 %v311
        %vm313 = vcmp.eq.s32.totalorder %v308, 0
        %vm314 = vmand %vm313, %vm307
        %v315 = vsel %vm314, 1, 0
        %v316 = vcvt.s32.f32 %v315
        %v318 = vrot.slane %v299, 1
        %v320 = vmax.f32 %v299, %v318
        %v321 = vrot.slane %v299, 2
        %v323 = vmax.f32 %v320, %v321
        %v324 = vrot.slane %v299, 3
        %v326 = vmax.f32 %v323, %v324
        %v327 = vrot.slane %v299, 4
        %v329 = vmax.f32 %v326, %v327
        %v330 = vrot.slane %v299, 5
        %v332 = vmax.f32 %v329, %v330
        %v333 = vrot.slane %v299, 6
        %v335 = vmax.f32 %v332, %v333
        %v336 = vrot.slane %v299, 7
        %v338 = vmax.f32 %v335, %v336
        %v339 = vsub.f32 %v299, %v338
        %v340 = vmul.f32 %v339, 1.442695
        %v341 = vpow.pop %v340
        %v342 = vadd.f32 %v341, 0.0
        %v344 = vrot.slane %v338, 7
        %v346 = vsub.f32 %v299, %v344
        %v347 = vmul.f32 %v346, 1.442695
        %v348 = vpow.pop %v347
        %v350 = vrot.slane %v348, 1
        %v352 = vadd.f32 %v342, %v350
        %v353 = vrot.slane %v338, 6
        %v355 = vsub.f32 %v299, %v353
        %v356 = vmul.f32 %v355, 1.442695
        %v357 = vpow.pop %v356
        %v359 = vrot.slane %v357, 2
        %v361 = vadd.f32 %v352, %v359
        %v362 = vrot.slane %v338, 5
        %v364 = vsub.f32 %v299, %v362
        %v365 = vmul.f32 %v364, 1.442695
        %v366 = vpow.pop %v365
        %v368 = vrot.slane %v366, 3
        %v370 = vadd.f32 %v361, %v368
        %v371 = vrot.slane %v338, 4
        %v373 = vsub.f32 %v299, %v371
        %v374 = vmul.f32 %v373, 1.442695
        %v375 = vpow.pop %v374
        %v377 = vrot.slane %v375, 4
        %v379 = vadd.f32 %v370, %v377
        %v380 = vrot.slane %v338, 3
        %v382 = vsub.f32 %v299, %v380
        %v383 = vmul.f32 %v382, 1.442695
        %v384 = vpow.pop %v383
        %v386 = vrot.slane %v384, 5
        %v388 = vadd.f32 %v379, %v386
        %v389 = vrot.slane %v338, 2
        %v391 = vsub.f32 %v299, %v389
        %v392 = vmul.f32 %v391, 1.442695
        %v393 = vpow.pop %v392
        %v395 = vrot.slane %v393, 6
        %v397 = vadd.f32 %v388, %v395
        %v398 = vrot.slane %v338, 1
        %v400 = vsub.f32 %v299, %v398
        %v401 = vmul.f32 %v400, 1.442695
        %v402 = vpow.pop %v401
        %v404 = vrot.slane %v402, 7
        %v406 = vadd.f32 %v397, %v404
        %v407 = vlog2.pop %v406
        %v408 = vmul.f32 %v407, 0.6931472
        %v409 = vadd.f32 %v338, %v408
        %vm410 = vcmp.eq.s32.totalorder %v308, 1
        %v411 = vsel %vm410, %v330, %v327
        %vm412 = vcmp.eq.s32.totalorder %v308, 2
        %v413 = vsel %vm412, %v333, %v411
        %vm414 = vcmp.eq.s32.totalorder %v308, 3
        %v415 = vsel %vm414, %v336, %v413
        %vm416 = vcmp.eq.s32.totalorder %v308, 4
        %v417 = vsel %vm416, %v299, %v415
        %vm418 = vcmp.eq.s32.totalorder %v308, 5
        %v419 = vsel %vm418, %v318, %v417
        %vm420 = vcmp.eq.s32.totalorder %v308, 6
        %v421 = vsel %vm420, %v321, %v419
        %vm422 = vcmp.eq.s32.totalorder %v308, 7
        %v423 = vsel %vm422, %v324, %v421
        %v425 = vrot.slane %v423, 4
        %v427 = vsub.f32 %v409, %v425
        %v428 = vsub.f32 %v409, %v299
        %v430 = vrot.slane %v428, 4
        %v432 = vmul.f32 %v316, %v430
        %433 = vst [vmem:[%s261 - $0x4] sm:$0x10] %v432
        %v434 = vmax.f32 %v300, %v301
        %v435 = vmin.f32 %v300, %v301
        %v437 = vrot.slane %v434, 6
        %v439 = vsub.f32 %v435, %v437
        %vm440 = vcmp.gt.f32.partialorder %v439, 0.0
        %v441 = vsel %vm440, 1, 0
        %v442 = vrot.slane %v441, 1
        %vm443 = vcmp.ne.s32.totalorder %v442, 0
        %vm444 = vmand %vm440, %vm443
        %v446 = vrot.slane %v439, 1
        %v448 = vmul.f32 %v439, %v446
        %v449 = vsel %vm444, %v448, 0.0
        %v451 = vrot.slane %v300, 6
        %v453 = vsub.f32 %v300, %v451
        %v455 = vrot.slane %v453, 1
        %v457 = vmul.f32 %v453, %v455
        %v459 = vrot.slane %v301, 6
        %v461 = vsub.f32 %v301, %v459
        %v463 = vrot.slane %v461, 1
        %v465 = vmul.f32 %v461, %v463
        %v466 = vadd.f32 %v457, %v465
        %v467 = vsub.f32 %v466, %v449
        %v468 = vadd.f32 %v467, 1e-07
        %v469 = vrcp.pop %v468
        %v470 = vmul.f32 %v449, %v469
        %v472 = vrot.slane %v435, 6
        %v474 = vsub.f32 %v434, %v472
        %v476 = vrot.slane %v474, 1
        %v478 = vmul.f32 %v474, %v476
        %v479 = vsub.f32 %v478, %v467
        %v480 = vadd.f32 %v478, 1e-07
        %v481 = vrcp.pop %v480
        %v482 = vmul.f32 %v479, %v481
        %v483 = vsub.f32 %v470, %v482
        %v484 = vsub.f32 1.0, %v483
        %v485 = vld [vmem:[#allocation2] sm:$0x1]
        %v487 = vrot.slane %v427, 4
        %v489 = vmul.f32 %v312, %v487
        %v491 = vcombine.high %v489, %v489
        %v493 = vunpack.c.l.s4 1966171168
        %v494 = vunpack.c.0.s8 %v493
        %v495 = vlaneseq
        %v496 = vshrl.u32 %v495, 7
        %v497 = vsub.s32 %v494, %v496
        %v498 = vrot.slane %v491, %v497
        %v500 = vunpack.c.l.s4 1966171168
        %v501 = vunpack.c.0.s8 %v500
        %v502 = vlaneseq
        %v503 = vshrl.u32 %v502, 7
        %v504 = vsub.s32 %v501, %v503
        %v505 = vrot.slane %v498, %v504
        %v507 = vadd.f32 %v485, %v505
        %508 = vst [vmem:[#allocation2] sm:$0x1] %v507
        %v509 = vld [vmem:[#allocation3] sm:$0x1]
        %v511 = vrot.slane %v484, 6
        %v513 = vmul.f32 %v312, %v511
        %v515 = vcombine.high %v513, %v513
        %v517 = vunpack.c.l.s4 1966171168
        %v518 = vunpack.c.0.s8 %v517
        %v519 = vlaneseq
        %v520 = vshrl.u32 %v519, 7
        %v521 = vsub.s32 %v518, %v520
        %v522 = vrot.slane %v515, %v521
        %v524 = vunpack.c.l.s4 1966171168
        %v525 = vunpack.c.0.s8 %v524
        %v526 = vlaneseq
        %v527 = vshrl.u32 %v526, 7
        %v528 = vsub.s32 %v525, %v527
        %v529 = vrot.slane %v522, %v528
        %v531 = vadd.f32 %v509, %v529
        %532 = vst [vmem:[#allocation3] sm:$0x1] %v531
        %v533 = vld [vmem:[#allocation4] sm:$0x1]
        %v535 = vcombine.high %v312, %v312
        %v537 = vunpack.c.l.s4 1966171168
        %v538 = vunpack.c.0.s8 %v537
        %v539 = vlaneseq
        %v540 = vshrl.u32 %v539, 7
        %v541 = vsub.s32 %v538, %v540
        %v542 = vrot.slane %v535, %v541
        %v544 = vunpack.c.l.s4 1966171168
        %v545 = vunpack.c.0.s8 %v544
        %v546 = vlaneseq
        %v547 = vshrl.u32 %v546, 7
        %v548 = vsub.s32 %v545, %v547
        %v549 = vrot.slane %v542, %v548
        %v551 = vadd.f32 %v533, %v549
        %552 = vst [vmem:[#allocation4] sm:$0x1] %v551
        %p553 = scmp.eq.s32.totalorder %s27, 2
        // Predicated region
        $region37: #{tpu_custom_call.1} parent=31 // pred_check
          %p554 = pneg %p553
        $region38: #{tpu_custom_call.1} parent=31 // pred_check_branch
          %556 = sbr.rel (%p554) target = $region40
        $region39: #{tpu_custom_call.1} parent=31 // pred_region
          %v557 = vld [vmem:[#allocation2] sm:$0x1]
          %vm558 = vcmask 1040384
          %v559 = vsel %vm558, %v557, 0.0
          %560 = vadd.xlane.f32.xlu0 %v559
          %v561 = vpop.xlane.xlu0 %560
          %v562 = vrot.slane %v561, 4
          %v563 = vadd.f32 %v561, %v562
          %v564 = vrot.slane %v563, 2
          %v565 = vadd.f32 %v563, %v564
          %v566 = vrot.slane %v565, 1
          %v567 = vadd.f32 %v565, %v566
          %s568 = vtos %v567
          %v569 = vld [vmem:[#allocation3] sm:$0x1]
          %v570 = vsel %vm558, %v569, 0.0
          %571 = vadd.xlane.f32.xlu0 %v570
          %v572 = vpop.xlane.xlu0 %571
          %v573 = vrot.slane %v572, 4
          %v574 = vadd.f32 %v572, %v573
          %v575 = vrot.slane %v574, 2
          %v576 = vadd.f32 %v574, %v575
          %v577 = vrot.slane %v576, 1
          %v578 = vadd.f32 %v576, %v577
          %s579 = vtos %v578
          %v580 = vld [vmem:[#allocation4] sm:$0x1]
          %v581 = vsel %vm558, %v580, 0.0
          %582 = vadd.xlane.f32.xlu0 %v581
          %v583 = vpop.xlane.xlu0 %582
          %v584 = vrot.slane %v583, 4
          %v585 = vadd.f32 %v583, %v584
          %v586 = vrot.slane %v585, 2
          %v587 = vadd.f32 %v585, %v586
          %v588 = vrot.slane %v587, 1
          %v589 = vadd.f32 %v587, %v588
          %s590 = vtos %v589
          %vm591 = vcmp.eq.s32.totalorder %v303, 0
          %vm592 = vcmp.eq.s32.totalorder %v303, 1
          %vm593 = vcmp.eq.s32.totalorder %v303, 2
          %v594 = vstv %s590
          %v595 = vsel %vm593, %v594, 0.0
          %v596 = vstv %s579
          %v597 = vsel %vm592, %v596, %v595
          %v598 = vstv %s568
          %v599 = vsel %vm591, %v598, %v597
          %600 = vst [vmem:[%s267] sm:$0x1] %v599
        $region40: #{tpu_custom_call.1} parent=31 // pred_fallthru
          _
        %s601 = sand.u32 %s128, 1
        %s602 = scalar_lea.sflag [#allocation6], %s601
        %s603 = sand.u32 %s128, 1
        %s604 = scalar_lea.vmem [#allocation5], %s603
        %s605 = sand.u32 %s154, 1
        %s606 = scalar_lea.sflag [#allocation8], %s605
        %s607 = sand.u32 %s154, 1
        %s608 = scalar_lea.vmem [#allocation7], %s607
        // Predicated region
        $region41: #{tpu_custom_call.1} parent=31 // pred_check
          %p609 = pneg %p138
        $region42: #{tpu_custom_call.1} parent=31 // pred_check_branch
          %611 = sbr.rel (%p609) target = $region44
        $region43: #{tpu_custom_call.1} parent=31 // pred_region
          %s613 = ssub.s32 16, 16
          %614 = vsyncadd %s602, %s613
          %s615 = smul.addr %s26, 3
          %s616 = sadd.s32 %s27, %s615
          %s617 = smul.addr %s616, 16
          %s618 = scalar_lea.hbm %s3, %s617
          %s620 = sshll.u32 %s604, 4
          %s621 = int_to_ptr.vmem [resolvable:$true] %s620
          %623 = dma.vmem_to_hbm [thread:$0]  %s621, 16, %s618, %s602
        $region44: #{tpu_custom_call.1} parent=31 // pred_fallthru
          _
        // Predicated region
        $region45: #{tpu_custom_call.1} parent=31 // pred_check
          %p624 = pneg %p164
        $region46: #{tpu_custom_call.1} parent=31 // pred_check_branch
          %626 = sbr.rel (%p624) target = $region48
        $region47: #{tpu_custom_call.1} parent=31 // pred_region
          %s628 = ssub.s32 16, 16
          %629 = vsyncadd %s606, %s628
          %s630 = smul.addr %s26, 16
          %s631 = scalar_lea.hbm %s4, %s630
          %s633 = sshll.u32 %s608, 4
          %s634 = int_to_ptr.vmem [resolvable:$true] %s633
          %636 = dma.vmem_to_hbm [thread:$0]  %s634, 16, %s631, %s606
        $region48: #{tpu_custom_call.1} parent=31 // pred_fallthru
          _
      $region32: #{tpu_custom_call.1} parent=5 // pred_fallthru
        _
      %p637 = scmp.le.s32.totalorder 2, %s17
      // Predicated region
      $region49: #{tpu_custom_call.1} parent=5 // pred_check
        %p638 = pneg %p637
      $region50: #{tpu_custom_call.1} parent=5 // pred_check_branch
        %640 = sbr.rel (%p638) target = $region52
      $region51: #{tpu_custom_call.1} parent=5 // pred_region
        %s641 = ssub.s32 %s17, 2
        // Predicated region
        $region53: #{tpu_custom_call.1} parent=51 // pred_check
          %p642 = pneg %p144
        $region54: #{tpu_custom_call.1} parent=51 // pred_check_branch
          %644 = sbr.rel (%p642) target = $region56
        $region55: #{tpu_custom_call.1} parent=51 // pred_region
          %s645 = sand.u32 %s129, 1
          %s646 = scalar_lea.sflag [#allocation6], %s645
          %s647 = sand.u32 %s129, 1
          %s648 = scalar_lea.vmem [#allocation5], %s647
          %649 = dma.done %s646, 16
        $region56: #{tpu_custom_call.1} parent=51 // pred_fallthru
          _
        // Predicated region
        $region57: #{tpu_custom_call.1} parent=51 // pred_check
          %p650 = pneg %p170
        $region58: #{tpu_custom_call.1} parent=51 // pred_check_branch
          %652 = sbr.rel (%p650) target = $region60
        $region59: #{tpu_custom_call.1} parent=51 // pred_region
          %s653 = sand.u32 %s155, 1
          %s654 = scalar_lea.sflag [#allocation8], %s653
          %s655 = sand.u32 %s155, 1
          %s656 = scalar_lea.vmem [#allocation7], %s655
          %657 = dma.done %s654, 16
        $region60: #{tpu_custom_call.1} parent=51 // pred_fallthru
          _
      $region52: #{tpu_custom_call.1} parent=5 // pred_fallthru
        _
    $region6: #{tpu_custom_call.1} parent=1 // loop_footer
      %s21 = sadd.s32 1, %s17
    $region7: #{tpu_custom_call.1} parent=1 // loop_footer_branch
      %16 = sbr.rel target = $region3
    $region8: #{tpu_custom_call.1} parent=1 // loop_exit
      _
    %658 = vsyncpa [#allocation6], 1
    %s659 = scalar_lea.sflag [#allocation6], 1
    %660 = vsyncpa %s659, 1
    %661 = vsyncpa [#allocation8], 1
    %s662 = scalar_lea.sflag [#allocation8], 1
    %663 = vsyncpa %s662, 1

</llo_original>
